<compile_context>
chip_gen: v5e
topology: v5e:2x2
jax: 0.10.0
libtpu: 0.0.40
codegen_flags: <defaults>
</compile_context>

<pallas_src>
import functools

import numpy as np
import jax
import jax.numpy as jnp
from jax.experimental import pallas as pl
from jax.experimental.pallas import tpu as pltpu


def _round_up(x, m):
    return ((x + m - 1) // m) * m


# --------------------------------------------------------------------------- #
# Pallas kernel: one-hot MXU gather + convex mix (with identity-prefix fast path)
# --------------------------------------------------------------------------- #
def _convex_expand_kernel(idx_a_ref, idx_b_ref, s_ref,   # (TILE_M, 1) VMEM blocks
                          z_ref,                         # (N, D) resident VMEM block
                          out_ref,                       # (TILE_M, D)
                          *, n_copy):
    tile_m, _ = out_ref.shape
    n = z_ref.shape[0]
    base = pl.program_id(0) * tile_m

    def mix_tile():
        # One-hot rows built with a vectorized lane-iota compare (VPU only).
        col = jax.lax.broadcasted_iota(jnp.int32, (tile_m, n), 1)
        oh_a = col == idx_a_ref[...]                     # (TILE_M, N) bool
        oh_b = col == idx_b_ref[...]
        s = s_ref[...]                                   # (TILE_M, 1) f32
        if z_ref.dtype == jnp.float32:
            # Fold s into the one-hot weights; exact-f32 MXU contraction.
            w = s * oh_a.astype(jnp.float32) + (1.0 - s) * oh_b.astype(jnp.float32)
            out = jnp.dot(w, z_ref[...],
                          precision=jax.lax.Precision.HIGHEST,
                          preferred_element_type=jnp.float32)
        else:
            # Gather with exact 1.0 one-hots in the native dtype (exact on the
            # MXU), then mix in f32 so s is never rounded to the narrow dtype.
            oh_dt = z_ref.dtype
            ga = jnp.dot(oh_a.astype(jnp.float32).astype(oh_dt), z_ref[...],
                         preferred_element_type=jnp.float32)
            gb = jnp.dot(oh_b.astype(jnp.float32).astype(oh_dt), z_ref[...],
                         preferred_element_type=jnp.float32)
            out = s * ga + (1.0 - s) * gb
        out_ref[...] = out.astype(out_ref.dtype)

    if n_copy >= tile_m:
        # Tiles entirely inside the identity prefix: dense sublane slice copy
        # of z (one aligned load + one dense store; no MXU work).
        is_copy_tile = base + tile_m <= n_copy

        @pl.when(is_copy_tile)
        def _():
            row = pl.multiple_of(base, tile_m)
            out_ref[...] = z_ref[pl.ds(row, tile_m), :]

        @pl.when(jnp.logical_not(is_copy_tile))
        def _():
            mix_tile()
    else:
        mix_tile()


def _pick_tile_m(m, sub, cap=256):
    """Largest tile that is a multiple of `sub`, <= cap, and (when possible)
    divides m exactly (no padded tail -> no post-kernel slice copy)."""
    if m <= sub:
        return sub
    best = None
    if m % sub == 0:
        t = sub
        while t <= min(m, cap):
            if m % t == 0:
                best = t
            t += sub
    if best is None:
        best = min(_round_up(m, sub), cap)
    # If everything fits in a single tile, split into two balanced tiles so
    # v7x's second TensorCore is not idle under "parallel" semantics.
    if _round_up(m, best) == best and m > sub:
        best = _round_up(-(-m // 2), sub)
    return best


def _convex_expand(z, idx_a, idx_b, s, *, n_copy=0, tile_m=None):
    """out[k] = s[k] * z[idx_a[k]] + (1 - s[k]) * z[idx_b[k]].

    The first `n_copy` rows are guaranteed by the caller to be identity copies
    (idx_a[k] == idx_b[k] == k, s[k] == 1), enabling a slice-copy fast path."""
    n, d = z.shape
    m = int(idx_a.shape[0])
    sub = 16 if z.dtype == jnp.bfloat16 else 8            # sublane packing
    if tile_m is None:
        tile_m = _pick_tile_m(m, sub)
    tile_m = _round_up(int(tile_m), sub)

    m_pad = _round_up(m, tile_m)
    pad = m_pad - m
    idx_a = jnp.asarray(idx_a, jnp.int32)
    idx_b = jnp.asarray(idx_b, jnp.int32)
    s = jnp.asarray(s, jnp.float32)
    if pad:                                               # padded tail -> copies z[0], sliced off
        idx_a = jnp.pad(idx_a, (0, pad))
        idx_b = jnp.pad(idx_b, (0, pad))
        s = jnp.pad(s, (0, pad), constant_values=1.0)
    ia2 = idx_a.reshape(m_pad, 1)
    ib2 = idx_b.reshape(m_pad, 1)
    s2 = s.reshape(m_pad, 1)

    # Explicit scoped-VMEM budget: resident z (x2 pipeline buffers), output
    # tile (x2) + f32 temp, one-hot/W temporaries, idx & s tiles (lane-padded).
    itm = z.dtype.itemsize
    need = (2 * n * d * itm
            + 2 * tile_m * d * (itm + 4)
            + 6 * tile_m * n * 4
            + 8 * tile_m * 4 * 128)
    vmem_limit = int(min(max(2 * need, 32 * 1024 ** 2), 64 * 1024 ** 2))

    grid_spec = pltpu.PrefetchScalarGridSpec(
        num_scalar_prefetch=0,
        grid=(m_pad // tile_m,),
        in_specs=[
            pl.BlockSpec((tile_m, 1), lambda t: (t, 0)),   # idx_a (VMEM)
            pl.BlockSpec((tile_m, 1), lambda t: (t, 0)),   # idx_b (VMEM)
            pl.BlockSpec((tile_m, 1), lambda t: (t, 0)),   # s     (VMEM)
            # z resident in VMEM: constant index_map -> fetched from HBM once.
            pl.BlockSpec((n, d), lambda t: (0, 0)),
        ],
        out_specs=pl.BlockSpec((tile_m, d), lambda t: (t, 0)),
    )
    out = pl.pallas_call(
        functools.partial(_convex_expand_kernel, n_copy=n_copy),
        grid_spec=grid_spec,
        out_shape=jax.ShapeDtypeStruct((m_pad, d), z.dtype),
        compiler_params=pltpu.CompilerParams(
            dimension_semantics=("parallel",),             # tiles independent -> v7x 2 TCs
            vmem_limit_bytes=vmem_limit),
    )(ia2, ib2, s2, z)
    return out if m_pad == m else out[:m]


def convex_mix(z, idx_a, idx_b, s, *, tile_m=None):
    """Only the mixed rows: (m, D)."""
    return _convex_expand(z, idx_a, idx_b, s, n_copy=0, tile_m=tile_m)


def convex_mix_concat(z, idx_a, idx_b, s, *, tile_m=None):
    """[z ; mix] of shape (N + m, D), produced by ONE kernel (no post-kernel
    concatenate that would re-stream all of z through HBM)."""
    n = z.shape[0]
    pre = jnp.arange(n, dtype=jnp.int32)
    ia = jnp.concatenate([pre, jnp.asarray(idx_a, jnp.int32)])
    ib = jnp.concatenate([pre, jnp.asarray(idx_b, jnp.int32)])
    sf = jnp.concatenate([jnp.ones((n,), jnp.float32), jnp.asarray(s, jnp.float32)])
    return _convex_expand(z, ia, ib, sf, n_copy=n, tile_m=tile_m)


# --------------------------------------------------------------------------- #
# On-device index-pair sampling (replaces the host np.random while-loop)
# --------------------------------------------------------------------------- #
@functools.partial(jax.jit, static_argnames=("pool", "num", "oversample"))
def sample_mix_pairs(key, labels, *, pool, num, oversample=16):
    """Draw `num` pairs (a, b) from [0, pool) with labels[a] != labels[b], plus
    uniform mixing coefficients s -- vectorized oversample-and-select, no host
    sync, no data-dependent loop."""
    k1, k2, k3 = jax.random.split(key, 3)
    cand_k = max(oversample * num, 64)
    cand_a = jax.random.randint(k1, (cand_k,), 0, pool, dtype=jnp.int32)
    cand_b = jax.random.randint(k2, (cand_k,), 0, pool, dtype=jnp.int32)
    cand_s = jax.random.uniform(k3, (cand_k,), dtype=jnp.float32)

    valid = (cand_a != cand_b) & (labels[cand_a] != labels[cand_b])
    rank = jnp.cumsum(valid.astype(jnp.int32)) - 1
    slot = jnp.where(valid, rank, num)                 # invalid / overflow -> dropped

    # Fallback pair (used only in the degenerate case of too few valid
    # candidates; NOTE if every label in [0, pool) is identical the fallback
    # can violate labels[a] != labels[b] -- the original module would spin
    # forever in that case, so it is a behavior divergence only there).
    fb_a = jnp.zeros((), jnp.int32)
    fb_b = jnp.argmax(labels[:pool] != labels[0]).astype(jnp.int32)

    idx_a = jnp.full((num,), fb_a, jnp.int32).at[slot].set(cand_a, mode="drop")
    idx_b = jnp.full((num,), fb_b, jnp.int32).at[slot].set(cand_b, mode="drop")
    s = jnp.full((num,), 0.5, jnp.float32).at[slot].set(cand_s, mode="drop")
    return idx_a, idx_b, s


# --------------------------------------------------------------------------- #
# ConvexSampler module
# --------------------------------------------------------------------------- #
class ConvexSampler:
    """JAX/Pallas port of models/Encoder.py::ConvexSampler (forward only)."""

    def __init__(self, num_convex, num_convex_val, n_oos, oos_label_id, seed=0):
        self.num_convex = num_convex
        self.num_convex_val = num_convex_val
        self.oos_num = n_oos
        self.oos_label_id = oos_label_id
        self._key = jax.random.PRNGKey(seed)           # deterministic np.random stand-in

    def __call__(self, z, label_ids, mode=None, key=None):
        n = int(label_ids.shape[0])
        if mode == 'train' and n > 2:
            # NOTE: pool = n - oos_num assumes (as the original does) that the
            # OOS rows are the last n_oos rows of z / label_ids.
            num, pool = self.num_convex, n - self.oos_num
        elif mode == 'val' and n > 2:
            num, pool = self.num_convex_val, n
        else:
            return z, label_ids
        if pool < 2 or num <= 0:                       # original would loop forever
            return z, label_ids

        if key is None:
            self._key, key = jax.random.split(self._key)
        idx_a, idx_b, s = sample_mix_pairs(key, label_ids, pool=pool, num=num)

        # Pallas kernel emits [z ; convex samples] directly (no HBM re-copy of z).
        z_out = convex_mix_concat(z, idx_a, idx_b, s)
        label_out = jnp.concatenate(
            [label_ids,
             jnp.full((num,), self.oos_label_id, dtype=label_ids.dtype)], axis=0)
        return z_out, label_out


# --------------------------------------------------------------------------- #
# Self-test
# --------------------------------------------------------------------------- #
if __name__ == "__main__":
    key = jax.random.PRNGKey(0)
    N, D = 8, 128
    num_convex, num_convex_val, n_oos, oos_label_id = 4, 4, 1, 5

    kz, ka, kb, ks = jax.random.split(key, 4)
    z = jax.random.normal(kz, (N, D), dtype=jnp.float32)
    # last row plays the role of an already-present OOS sample
    label_ids = jnp.array([0, 1, 2, 0, 1, 2, 3, oos_label_id], dtype=jnp.int32)

    # --- kernel check 1: m not a multiple of 8 (padding path), single tile ---
    idx_a = jnp.array([0, 2, 5, 6, 3], dtype=jnp.int32)
    idx_b = jnp.array([1, 3, 4, 0, 7], dtype=jnp.int32)
    s = jnp.array([0.25, 0.6, 0.9, 0.1, 0.5], dtype=jnp.float32)
    got = convex_mix(z, idx_a, idx_b, s)
    ref = s[:, None] * z[idx_a] + (1.0 - s)[:, None] * z[idx_b]
    jax.block_until_ready(got)
    np.testing.assert_allclose(np.asarray(got), np.asarray(ref),
                               rtol=1e-5, atol=1e-5)

    # --- kernel check 2: multiple grid tiles (tile_m=8, m=20 -> 3 tiles) ------
    m2 = 20
    idx_a2 = jax.random.randint(ka, (m2,), 0, N, dtype=jnp.int32)
    idx_b2 = jax.random.randint(kb, (m2,), 0, N, dtype=jnp.int32)
    s2 = jax.random.uniform(ks, (m2,), dtype=jnp.float32)
    got2 = convex_mix(z, idx_a2, idx_b2, s2, tile_m=8)
    ref2 = s2[:, None] * z[idx_a2] + (1.0 - s2)[:, None] * z[idx_b2]
    jax.block_until_ready(got2)
    np.testing.assert_allclose(np.asarray(got2), np.asarray(ref2),
                               rtol=1e-5, atol=1e-5)

    # --- kernel check 3: fused [z ; mix] output (prefix fast path + mix tile) -
    got3 = convex_mix_concat(z, idx_a, idx_b, s)
    jax.block_until_ready(got3)
    np.testing.assert_allclose(np.asarray(got3[:N]), np.asarray(z),
                               rtol=1e-6, atol=1e-6)
    np.testing.assert_allclose(np.asarray(got3[N:]), np.asarray(ref),
                               rtol=1e-5, atol=1e-5)

    # --- full ConvexSampler forward ------------------------------------------
    sampler = ConvexSampler(num_convex, num_convex_val, n_oos, oos_label_id,
                            seed=0)
    ktrain = jax.random.PRNGKey(7)
    z_out, labels_out = sampler(z, label_ids, mode='train', key=ktrain)
    jax.block_until_ready(z_out)
    jax.block_until_ready(labels_out)
    assert z_out.shape == (N + num_convex, D)
    assert labels_out.shape == (N + num_convex,)
    assert bool(jnp.all(labels_out[N:] == oos_label_id))
    assert bool(jnp.all(labels_out[:N] == label_ids))
    np.testing.assert_allclose(np.asarray(z_out[:N]), np.asarray(z),
                               rtol=1e-6, atol=1e-6)

    # reproduce the sampled pairs with the same key and check the appended rows
    ia, ib, ss = sample_mix_pairs(ktrain, label_ids, pool=N - n_oos,
                                  num=num_convex)
    assert bool(jnp.all(label_ids[ia] != label_ids[ib]))        # distinct labels
    ref_samples = ss[:, None] * z[ia] + (1.0 - ss)[:, None] * z[ib]
    np.testing.assert_allclose(np.asarray(z_out[N:]), np.asarray(ref_samples),
                               rtol=1e-5, atol=1e-5)

    # val mode
    z_val, labels_val = sampler(z, label_ids, mode='val')
    jax.block_until_ready(z_val)
    assert z_val.shape == (N + num_convex_val, D)
    assert labels_val.shape == (N + num_convex_val,)

    # pass-through mode (no-op path)
    z_same, labels_same = sampler(z, label_ids, mode=None)
    assert z_same.shape == z.shape and labels_same.shape == label_ids.shape

    print("KERNEL_OK")
</pallas_src>

<mosaic_0001>
module attributes {stable_mosaic.version = 11 : i64} {
  func.func @_convex_expand_kernel(%arg0: i32, %arg1: memref<8x1xi32, #tpu.memory_space<vmem>>, %arg2: memref<8x1xi32, #tpu.memory_space<vmem>>, %arg3: memref<8x1xf32, #tpu.memory_space<vmem>>, %arg4: memref<8x128xf32, #tpu.memory_space<vmem>>, %arg5: memref<8x128xf32, #tpu.memory_space<vmem>>) attributes {dimension_semantics = [#tpu.dimension_semantics<parallel>], iteration_bounds = array<i64: 1>, scalar_prefetch = 0 : i64, scratch_operands = 0 : i64, tpu.core_type = #tpu.core_type<tc>, window_params = [{transform_indices = @transform_0, window_bounds = array<i64: 8, 1>}, {transform_indices = @transform_1, window_bounds = array<i64: 8, 1>}, {transform_indices = @transform_2, window_bounds = array<i64: 8, 1>}, {pipeline_mode = #tpu.pipeline_mode<synchronous>, transform_indices = @transform_3, window_bounds = array<i64: 8, 128>}, {transform_indices = @transform_4, window_bounds = array<i64: 8, 128>}]} {
    %0 = tpu.iota {dimensions = array<i32: 1>} : vector<8x8xi32>
    %c0 = arith.constant 0 : index
    %c0_0 = arith.constant 0 : index
    %1 = vector.load %arg1[%c0, %c0_0] : memref<8x1xi32, #tpu.memory_space<vmem>>, vector<8x1xi32>
    %2 = vector.broadcast %1 : vector<8x1xi32> to vector<8x8xi32>
    %3 = arith.cmpi eq, %0, %2 : vector<8x8xi32>
    %c0_1 = arith.constant 0 : index
    %c0_2 = arith.constant 0 : index
    %4 = vector.load %arg2[%c0_1, %c0_2] : memref<8x1xi32, #tpu.memory_space<vmem>>, vector<8x1xi32>
    %5 = vector.broadcast %4 : vector<8x1xi32> to vector<8x8xi32>
    %6 = arith.cmpi eq, %0, %5 : vector<8x8xi32>
    %c0_3 = arith.constant 0 : index
    %c0_4 = arith.constant 0 : index
    %7 = vector.load %arg3[%c0_3, %c0_4] : memref<8x1xf32, #tpu.memory_space<vmem>>, vector<8x1xf32>
    %8 = arith.extui %3 : vector<8x8xi1> to vector<8x8xi32>
    %9 = arith.sitofp %8 : vector<8x8xi32> to vector<8x8xf32>
    %10 = vector.broadcast %7 : vector<8x1xf32> to vector<8x8xf32>
    %11 = arith.mulf %10, %9 : vector<8x8xf32>
    %cst = arith.constant 1.000000e+00 : f32
    %12 = vector.broadcast %cst : f32 to vector<8x1xf32>
    %13 = arith.subf %12, %7 : vector<8x1xf32>
    %14 = arith.extui %6 : vector<8x8xi1> to vector<8x8xi32>
    %15 = arith.sitofp %14 : vector<8x8xi32> to vector<8x8xf32>
    %16 = vector.broadcast %13 : vector<8x1xf32> to vector<8x8xf32>
    %17 = arith.mulf %16, %15 : vector<8x8xf32>
    %18 = arith.addf %11, %17 : vector<8x8xf32>
    %c0_5 = arith.constant 0 : index
    %c0_6 = arith.constant 0 : index
    %19 = vector.load %arg4[%c0_5, %c0_6] : memref<8x128xf32, #tpu.memory_space<vmem>>, vector<8x128xf32>
    %cst_7 = arith.constant dense<0.000000e+00> : vector<8x128xf32>
    %20 = tpu.matmul %18, %19, %cst_7 {dimension_numbers = #tpu.dot_dimension_numbers<[1], [0], [0], [1], [0, 0, 1, 1], [], []>, precision = #tpu.contract_precision<fp32>} : vector<8x8xf32>, vector<8x128xf32>, vector<8x128xf32> -> vector<8x128xf32>
    %c0_8 = arith.constant 0 : index
    %c0_9 = arith.constant 0 : index
    %21 = vector.load %arg5[%c0_8, %c0_9] : memref<8x128xf32, #tpu.memory_space<vmem>>, vector<8x128xf32>
    tpu.vector_store %arg5[%c0_8, %c0_9], %20 {strides = array<i32>} : memref<8x128xf32, #tpu.memory_space<vmem>>, vector<8x128xf32>,
    return
  }
  func.func @transform_0(%arg0: i32) -> (i32, i32) {
    %c0_i32 = arith.constant 0 : i32
    %c0_i32_0 = arith.constant 0 : i32
    return %arg0, %c0_i32 : i32, i32
  }
  func.func @transform_1(%arg0: i32) -> (i32, i32) {
    %c0_i32 = arith.constant 0 : i32
    %c0_i32_0 = arith.constant 0 : i32
    return %arg0, %c0_i32 : i32, i32
  }
  func.func @transform_2(%arg0: i32) -> (i32, i32) {
    %c0_i32 = arith.constant 0 : i32
    %c0_i32_0 = arith.constant 0 : i32
    return %arg0, %c0_i32 : i32, i32
  }
  func.func @transform_3(%arg0: i32) -> (i32, i32) {
    %c0_i32 = arith.constant 0 : i32
    %c0_i32_0 = arith.constant 0 : i32
    %c0_i32_1 = arith.constant 0 : i32
    return %c0_i32, %c0_i32_0 : i32, i32
  }
  func.func @transform_4(%arg0: i32) -> (i32, i32) {
    %c0_i32 = arith.constant 0 : i32
    %c0_i32_0 = arith.constant 0 : i32
    return %arg0, %c0_i32 : i32, i32
  }
}

</mosaic_0001>

<llo_original>
// kernel: tpu_custom_call.1
$region0: #{tpu_custom_call.1}
  #allocation0 [shape = 'u32[]', space=smem, size = 0x4, offset = 0x4, fixed_abs, tag = 'smem constant byte address 0x4 - core index']
  #allocation1 [shape = 'u32[72,128]{1,0:T(1,128)}', space=vmem, size = 0x9000, scoped, tag = 'internal scratch']
  %s0 = inlined_call_operand.vmem [shape: s32[8,1], index: 0, kind: input, shape index: {}]
  %s1 = inlined_call_operand.vmem [shape: s32[8,1], index: 1, kind: input, shape index: {}]
  %s2 = inlined_call_operand.vmem [shape: f32[8,1], index: 2, kind: input, shape index: {}]
  %s3 = inlined_call_operand.vmem [shape: f32[8,128], index: 3, kind: input, shape index: {}]
  %s4 = inlined_call_operand.hbm [shape: f32[8,128], index: 4, kind: output, shape index: {}]
  %s5 = sld [smem:[#allocation0]]
  $region26: #{tpu_custom_call.1} parent=0
    _
  %s7 = ssub.s32 1, %s5
  %s8 = scalar_select 0, %s7, %s5
  $region1: #{tpu_custom_call.1} parent=0
    #allocation2 [shape = 'u8[4096]{0}', space=vmem, size = 0x1000, scoped, tag = 'output window, operand 0, single buffered']
    #allocation3 [shape = 's32[1]{0}', space=sflag, size = 0x4, scoped, tag = 'scoped memory for tpu_custom_call.1']
    %9 = vsyncpa [#allocation3], 0
    // Predicated region
    $region2: #{tpu_custom_call.1} parent=1 // pred_check
      _
    $region3: #{tpu_custom_call.1} parent=1 // pred_check_branch
      %11 = sbr.rel (0) target = $region5
    $region4: #{tpu_custom_call.1} parent=1 // pred_region
      _
    $region5: #{tpu_custom_call.1} parent=1 // pred_fallthru
      _
    // Predicated region
    $region6: #{tpu_custom_call.1} parent=1 // pred_check
      _
    $region7: #{tpu_custom_call.1} parent=1 // pred_check_branch
      %13 = sbr.rel (0) target = $region9
    $region8: #{tpu_custom_call.1} parent=1 // pred_region
      _
    $region9: #{tpu_custom_call.1} parent=1 // pred_fallthru
      _
    // Predicated region
    $region10: #{tpu_custom_call.1} parent=1 // pred_check
      _
    $region11: #{tpu_custom_call.1} parent=1 // pred_check_branch
      %15 = sbr.rel (0) target = $region13
    $region12: #{tpu_custom_call.1} parent=1 // pred_region
      _
    $region13: #{tpu_custom_call.1} parent=1 // pred_fallthru
      _
    // Predicated region
    $region14: #{tpu_custom_call.1} parent=1 // pred_check
      _
    $region15: #{tpu_custom_call.1} parent=1 // pred_check_branch
      %17 = sbr.rel (0) target = $region17
    $region16: #{tpu_custom_call.1} parent=1 // pred_region
      _
    $region17: #{tpu_custom_call.1} parent=1 // pred_fallthru
      _
    %v18 = vlaneseq
    %v19 = vand.u32 %v18, 127
    %v20 = vld [vmem:[%s0] sm:$0xff]
    %21 = vset.pattern.permute.xlu0 0
    %22 = vperm.xlu0 %21, %v20
    %v23 = vpop.permute.xlu0 %22
    %vm24 = vcmp.eq.s32.totalorder %v19, %v23
    %v25 = vld [vmem:[%s1] sm:$0xff]
    %26 = vset.pattern.permute.xlu0 0
    %27 = vperm.xlu0 %26, %v25
    %v28 = vpop.permute.xlu0 %27
    %vm29 = vcmp.eq.s32.totalorder %v19, %v28
    %v30 = vld [vmem:[%s2] sm:$0xff]
    %v31 = vsel %vm24, 1, 0
    %v32 = vcvt.s32.f32 %v31
    %34 = vset.pattern.permute.xlu0 0
    %35 = vperm.xlu0 %34, %v30
    %v36 = vpop.permute.xlu0 %35
    %v38 = vmul.f32 %v36, %v32
    %v39 = vsub.f32 1.0, %v30
    %v40 = vsel %vm29, 1, 0
    %v41 = vcvt.s32.f32 %v40
    %43 = vset.pattern.permute.xlu0 0
    %44 = vperm.xlu0 %43, %v39
    %v45 = vpop.permute.xlu0 %44
    %v47 = vmul.f32 %v45, %v41
    %v48 = vadd.f32 %v38, %v47
    %v49 = vld [vmem:[%s3] sm:$0xff]
    %vm50 = vcmask 64512
    %v52 = vsel %vm50, %v48, 0
    %54 = vmatpush.msra.mxu0 0.0
    %55 = vmatpush.msra.mxu0 0.0
    %56 = vmatpush.msra.mxu0 0.0
    %57 = vmatpush.msra.mxu0 0.0
    %58 = vmatpush.msra.mxu0 0.0
    %59 = vmatpush.msra.mxu0 0.0
    %60 = vmatpush.msra.mxu0 0.0
    %61 = vmatpush.msra.mxu0 0.0
    %62 = vmatpush.msra.mxu0 0.0
    %63 = vmatpush.msra.mxu0 0.0
    %64 = vmatpush.msra.mxu0 0.0
    %65 = vmatpush.msra.mxu0 0.0
    %66 = vmatpush.msra.mxu0 0.0
    %67 = vmatpush.msra.mxu0 0.0
    %68 = vmatpush.msra.mxu0 0.0
    %v69 = vand.u32 %v49, 4294901760
    %70 = vmatpush.msra.mxu0 %v69
    %v71 = vand.u32 %v52, 4294901760
    %v72 = vsub.f32 %v52, %v71
    %v73 = vand.u32 %v72, 4294901760
    %v74 = vsub.f32 %v72, %v73
    %v75 = vand.u32 %v74, 4294901760
    %76 = vmatmul.f32.gmra.mxu0 %v75
    %v77 = vpop.f32.mrf.mxu0
    %v78 = vadd.f32 0.0, %v77
    %79 = vdwg.mxu0
    %80 = vmatpush.msra.mxu0 0.0
    %81 = vmatpush.msra.mxu0 0.0
    %82 = vmatpush.msra.mxu0 0.0
    %83 = vmatpush.msra.mxu0 0.0
    %84 = vmatpush.msra.mxu0 0.0
    %85 = vmatpush.msra.mxu0 0.0
    %86 = vmatpush.msra.mxu0 0.0
    %87 = vmatpush.msra.mxu0 0.0
    %88 = vmatpush.msra.mxu0 0.0
    %89 = vmatpush.msra.mxu0 0.0
    %90 = vmatpush.msra.mxu0 0.0
    %91 = vmatpush.msra.mxu0 0.0
    %92 = vmatpush.msra.mxu0 0.0
    %93 = vmatpush.msra.mxu0 0.0
    %94 = vmatpush.msra.mxu0 0.0
    %v95 = vand.u32 %v49, 4294901760
    %v96 = vsub.f32 %v49, %v95
    %v97 = vand.u32 %v96, 4294901760
    %v98 = vsub.f32 %v96, %v97
    %v99 = vand.u32 %v98, 4294901760
    %100 = vmatpush.msra.mxu0 %v99
    %v101 = vand.u32 %v52, 4294901760
    %102 = vmatmul.f32.gmra.mxu0 %v101
    %v103 = vpop.f32.mrf.mxu0
    %v104 = vadd.f32 %v78, %v103
    %105 = vdwg.mxu0
    %106 = vmatpush.msra.mxu0 0.0
    %107 = vmatpush.msra.mxu0 0.0
    %108 = vmatpush.msra.mxu0 0.0
    %109 = vmatpush.msra.mxu0 0.0
    %110 = vmatpush.msra.mxu0 0.0
    %111 = vmatpush.msra.mxu0 0.0
    %112 = vmatpush.msra.mxu0 0.0
    %113 = vmatpush.msra.mxu0 0.0
    %114 = vmatpush.msra.mxu0 0.0
    %115 = vmatpush.msra.mxu0 0.0
    %116 = vmatpush.msra.mxu0 0.0
    %117 = vmatpush.msra.mxu0 0.0
    %118 = vmatpush.msra.mxu0 0.0
    %119 = vmatpush.msra.mxu0 0.0
    %120 = vmatpush.msra.mxu0 0.0
    %v121 = vand.u32 %v49, 4294901760
    %v122 = vsub.f32 %v49, %v121
    %123 = vmatpush.msra.mxu0 %v122
    %v124 = vand.u32 %v52, 4294901760
    %v125 = vsub.f32 %v52, %v124
    %126 = vmatmul.f32.gmra.mxu0 %v125
    %v127 = vpop.f32.mrf.mxu0
    %v128 = vadd.f32 %v104, %v127
    %129 = vdwg.mxu0
    %130 = vmatpush.msra.mxu0 0.0
    %131 = vmatpush.msra.mxu0 0.0
    %132 = vmatpush.msra.mxu0 0.0
    %133 = vmatpush.msra.mxu0 0.0
    %134 = vmatpush.msra.mxu0 0.0
    %135 = vmatpush.msra.mxu0 0.0
    %136 = vmatpush.msra.mxu0 0.0
    %137 = vmatpush.msra.mxu0 0.0
    %138 = vmatpush.msra.mxu0 0.0
    %139 = vmatpush.msra.mxu0 0.0
    %140 = vmatpush.msra.mxu0 0.0
    %141 = vmatpush.msra.mxu0 0.0
    %142 = vmatpush.msra.mxu0 0.0
    %143 = vmatpush.msra.mxu0 0.0
    %144 = vmatpush.msra.mxu0 0.0
    %v145 = vand.u32 %v49, 4294901760
    %146 = vmatpush.msra.mxu0 %v145
    %v147 = vand.u32 %v52, 4294901760
    %v148 = vsub.f32 %v52, %v147
    %v149 = vand.u32 %v148, 4294901760
    %150 = vmatmul.f32.gmra.mxu0 %v149
    %v151 = vpop.f32.mrf.mxu0
    %v152 = vadd.f32 %v128, %v151
    %153 = vdwg.mxu0
    %154 = vmatpush.msra.mxu0 0.0
    %155 = vmatpush.msra.mxu0 0.0
    %156 = vmatpush.msra.mxu0 0.0
    %157 = vmatpush.msra.mxu0 0.0
    %158 = vmatpush.msra.mxu0 0.0
    %159 = vmatpush.msra.mxu0 0.0
    %160 = vmatpush.msra.mxu0 0.0
    %161 = vmatpush.msra.mxu0 0.0
    %162 = vmatpush.msra.mxu0 0.0
    %163 = vmatpush.msra.mxu0 0.0
    %164 = vmatpush.msra.mxu0 0.0
    %165 = vmatpush.msra.mxu0 0.0
    %166 = vmatpush.msra.mxu0 0.0
    %167 = vmatpush.msra.mxu0 0.0
    %168 = vmatpush.msra.mxu0 0.0
    %v169 = vand.u32 %v49, 4294901760
    %v170 = vsub.f32 %v49, %v169
    %v171 = vand.u32 %v170, 4294901760
    %172 = vmatpush.msra.mxu0 %v171
    %v173 = vand.u32 %v52, 4294901760
    %174 = vmatmul.f32.gmra.mxu0 %v173
    %v175 = vpop.f32.mrf.mxu0
    %v176 = vadd.f32 %v152, %v175
    %177 = vdwg.mxu0
    %178 = vmatpush.msra.mxu0 0.0
    %179 = vmatpush.msra.mxu0 0.0
    %180 = vmatpush.msra.mxu0 0.0
    %181 = vmatpush.msra.mxu0 0.0
    %182 = vmatpush.msra.mxu0 0.0
    %183 = vmatpush.msra.mxu0 0.0
    %184 = vmatpush.msra.mxu0 0.0
    %185 = vmatpush.msra.mxu0 0.0
    %186 = vmatpush.msra.mxu0 0.0
    %187 = vmatpush.msra.mxu0 0.0
    %188 = vmatpush.msra.mxu0 0.0
    %189 = vmatpush.msra.mxu0 0.0
    %190 = vmatpush.msra.mxu0 0.0
    %191 = vmatpush.msra.mxu0 0.0
    %192 = vmatpush.msra.mxu0 0.0
    %v193 = vand.u32 %v49, 4294901760
    %194 = vmatpush.msra.mxu0 %v193
    %v195 = vand.u32 %v52, 4294901760
    %196 = vmatmul.f32.gmra.mxu0 %v195
    %v197 = vpop.f32.mrf.mxu0
    %v198 = vadd.f32 %v176, %v197
    %199 = vdwg.mxu0
    %200 = vst [vmem:[#allocation2] sm:$0xff] %v198
    // Predicated region
    $region18: #{tpu_custom_call.1} parent=1 // pred_check
      _
    $region19: #{tpu_custom_call.1} parent=1 // pred_check_branch
      %202 = sbr.rel (0) target = $region21
    $region20: #{tpu_custom_call.1} parent=1 // pred_region
      %204 = vsyncadd [#allocation3], 0
      %s206 = sshll.u32 [#allocation2], 4
      %s207 = int_to_ptr.vmem [resolvable:$true] %s206
      %s208 = sshll.u32 %s4, 4
      %s209 = int_to_ptr.hbm [resolvable:$true] %s208
      %211 = dma.vmem_to_hbm [thread:$0]  %s207, 128, %s209, [#allocation3]
    $region21: #{tpu_custom_call.1} parent=1 // pred_fallthru
      _
    // Predicated region
    $region22: #{tpu_custom_call.1} parent=1 // pred_check
      _
    $region23: #{tpu_custom_call.1} parent=1 // pred_check_branch
      %213 = sbr.rel (0) target = $region25
    $region24: #{tpu_custom_call.1} parent=1 // pred_region
      %215 = dma.done [#allocation3], 128
    $region25: #{tpu_custom_call.1} parent=1 // pred_fallthru
      _
    %216 = vsyncpa [#allocation3], 1

</llo_original>
